<compile_context>
chip_gen: v6e
topology: v6e:2x2x1
jax: 0.10.0
libtpu: 0.0.40
codegen_flags: <defaults>
</compile_context>

<pallas_src>
import functools

import jax
import jax.numpy as jnp
import numpy as np
from jax.experimental import pallas as pl
from jax.experimental.pallas import tpu as pltpu

TB_MAX = 4096  # batch-tile cap (lanes)


def _round_up(x, m):
    return ((x + m - 1) // m) * m


def _choose_tiling(batch):
    """Pick (TB, B_pad, n_tiles): big lane-dense tiles, >=2 tiles when possible."""
    b128 = _round_up(batch, 128)
    if b128 <= 128:
        return b128, b128, 1
    n = max(2, pl.cdiv(b128, TB_MAX))
    if n % 2:
        n += 1                      # even tile count -> both TCs busy on v7x
    tb = _round_up(pl.cdiv(b128, n), 128)
    b_pad = _round_up(b128, tb)
    return tb, b_pad, b_pad // tb


def dfm_kernel(x_ref, lin_ref, w1s_ref, w2t_ref, bvec_ref, out_ref,
               *, embed_dim, h1, h2):
    """One batch tile.  Layout is batch-on-lanes (embed-major rows: d = e*F + f).
       x_ref    : (D, TB)       bf16  flat embeddings
       lin_ref  : (1, TB)       f32   linear term + global bias + final-layer bias
       w1s_ref  : (E+H1, D)     f32   [field-sum selector ; w1^T (columns permuted)]
       w2t_ref  : (H2, H1)      f32   second Linear, pre-transposed
       bvec_ref : (H1+2*H2, 1)  f32   [b1 ; b2 ; w3]
       out_ref  : (1, TB)       f32   sigmoid(linear + fm + mlp), lane-dense
    """
    E, H1, H2 = embed_dim, h1, h2
    x = x_ref[...].astype(jnp.float32)                                 # (D, TB)

    # One MXU call gives both the FM field-sum (selector rows) and the MLP
    # first-layer pre-activation (w1^T rows).  f32 x f32 -> f32.
    r = jnp.dot(w1s_ref[...], x, preferred_element_type=jnp.float32)   # (E+H1, TB)
    sum_f = r[0:E, :]                                                  # (E, TB)

    # ---- FactorizationMachine(reduce_sum=True) ----
    sum_sq_all = jnp.sum(x * x, axis=0, keepdims=True)                 # (1, TB)
    fm = 0.5 * (jnp.sum(sum_f * sum_f, axis=0, keepdims=True) - sum_sq_all)

    # ---- MLP: [Linear -> BatchNorm1d -> ReLU -> Dropout] x 2 -> Linear(1) ----
    # BatchNorm1d at default init in eval mode is the identity; Dropout is a
    # no-op at inference, so both fold away here.
    # TODO(synk): training-mode BatchNorm statistics / Dropout masking not implemented;
    #             for trained checkpoints fold BN running stats into w1/b1, w2/b2.
    bvec = bvec_ref[...]                                               # (H1+2*H2, 1)
    b1 = bvec[0:H1, :]
    b2 = bvec[H1:H1 + H2, :]
    w3 = bvec[H1 + H2:H1 + 2 * H2, :]

    h = jnp.maximum(r[E:E + H1, :] + b1, 0.0)                          # (H1, TB)
    h = jnp.dot(w2t_ref[...], h, preferred_element_type=jnp.float32) + b2
    h = jnp.maximum(h, 0.0)                                            # (H2, TB)
    # Final H2 -> 1 layer as a VPU multiply + sublane reduce (keeps result lane-dense).
    mlp = jnp.sum(h * w3, axis=0, keepdims=True)                       # (1, TB)

    out_ref[...] = jax.nn.sigmoid(lin_ref[...] + fm + mlp)


@jax.jit
def deep_fm_forward(x, params):
    """x: int32 (B, F) categorical indices per field. Returns float32 (B,)."""
    B, F = x.shape
    E = params["embed_table"].shape[1]
    D = F * E
    H1 = params["w1"].shape[1]
    H2 = params["w2"].shape[1]

    TB, B_pad, n_tiles = _choose_tiling(B)

    # Pad the *indices* (pad rows point at row 0) so the pad fuses into the gather.
    idx = x + params["offsets"][None, :]                               # (B, F)
    idx_pad = jnp.pad(idx, ((0, B_pad - B), (0, 0)))                   # (B_pad, F)

    # bf16 gather from the pre-transposed (E, vocab) table -> (E, F, B_pad),
    # then a contiguous reshape to (D, B_pad) with embed-major rows d = e*F + f.
    # Batch lands on lanes with no materialized minor-dim transpose.
    x_t = jnp.take(params["embed_table_bf16_t"], idx_pad.T, axis=1).reshape(D, B_pad)

    # FeaturesLinear pre-summed in the wrapper (fuses into its gather); global
    # bias and the final MLP layer's bias are folded in here as well.
    lin = (jnp.sum(params["linear_table"][idx_pad][..., 0], axis=1)
           + params["bias"][0, 0] + params["b3"][0, 0])                # (B_pad,)
    lin_row = lin.reshape(1, B_pad).astype(jnp.float32)

    # First-layer weight, columns permuted from PyTorch's field-major flat order
    # (f*E + e) to the kernel's embed-major order (e*F + f), stacked under a
    # static 0/1 selector that makes the MXU also produce the FM field-sum.
    w1t_em = params["w1"].T.reshape(H1, F, E).transpose(0, 2, 1).reshape(H1, D)
    sel = jnp.asarray(np.kron(np.eye(E, dtype=np.float32),
                              np.ones((1, F), np.float32)))            # (E, D)
    w1_stack = jnp.concatenate([sel, w1t_em.astype(jnp.float32)], axis=0)  # (E+H1, D)

    w2t = params["w2"].T.astype(jnp.float32)                           # (H2, H1)
    bvec = jnp.concatenate([params["b1"].reshape(H1, 1),
                            params["b2"].reshape(H2, 1),
                            params["w3"].reshape(H2, 1)],
                           axis=0).astype(jnp.float32)                 # (H1+2*H2, 1)

    kernel = functools.partial(dfm_kernel, embed_dim=E, h1=H1, h2=H2)
    out = pl.pallas_call(
        kernel,
        out_shape=jax.ShapeDtypeStruct((1, B_pad), jnp.float32),
        grid=(n_tiles,),
        in_specs=[
            pl.BlockSpec((D, TB), lambda i: (0, i)),            # flat embeddings (bf16)
            pl.BlockSpec((1, TB), lambda i: (0, i)),            # linear term (lane-dense)
            pl.BlockSpec((E + H1, D), lambda i: (0, 0)),        # selector + w1^T (resident)
            pl.BlockSpec((H2, H1), lambda i: (0, 0)),           # w2^T (resident)
            pl.BlockSpec((H1 + 2 * H2, 1), lambda i: (0, 0)),   # packed [b1; b2; w3]
        ],
        out_specs=pl.BlockSpec((1, TB), lambda i: (0, i)),
        compiler_params=pltpu.CompilerParams(
            dimension_semantics=("parallel",),
            vmem_limit_bytes=16 * 1024 * 1024,
        ),
    )(x_t, lin_row, w1_stack, w2t, bvec)

    return out[0, :B]                                                  # squeeze(1)


def make_params(key, field_dims, embed_dim, mlp_dims):
    F = len(field_dims)
    total = int(np.sum(field_dims))
    D = F * embed_dim
    ks = jax.random.split(key, 6)

    offsets = jnp.asarray(np.concatenate([[0], np.cumsum(field_dims)[:-1]]), jnp.int32)

    def linear_init(k, fan_in, fan_out):
        bound = 1.0 / np.sqrt(fan_in)
        kw, kb = jax.random.split(k)
        w = jax.random.uniform(kw, (fan_in, fan_out), jnp.float32, -bound, bound)
        b = jax.random.uniform(kb, (1, fan_out), jnp.float32, -bound, bound)
        return w, b

    w1, b1 = linear_init(ks[2], D, mlp_dims[0])
    w2, b2 = linear_init(ks[3], mlp_dims[0], mlp_dims[1])
    w3, b3 = linear_init(ks[4], mlp_dims[1], 1)

    embed_table = jax.random.normal(ks[0], (total, embed_dim), jnp.float32) * 0.01
    return {
        "offsets": offsets,
        "embed_table": embed_table,
        # bf16, pre-transposed (E, vocab) copy used by the kernel-facing gather.
        "embed_table_bf16_t": embed_table.T.astype(jnp.bfloat16),
        "linear_table": jax.random.normal(ks[1], (total, 1), jnp.float32) * 0.01,
        "bias": jnp.zeros((1, 1), jnp.float32),
        "w1": w1, "b1": b1,
        "w2": w2, "b2": b2,
        "w3": w3, "b3": b3,
    }


def deep_fm_reference_f32(x, params):
    """Pure-JAX f32 reference of the PyTorch forward (eval mode)."""
    idx = x + params["offsets"][None, :]
    embed_x = params["embed_table"][idx]
    lin = jnp.sum(params["linear_table"][idx][..., 0], axis=1) + params["bias"][0, 0]
    s = jnp.sum(embed_x, axis=1)
    sq = jnp.sum(embed_x ** 2, axis=1)
    fm = 0.5 * jnp.sum(s * s - sq, axis=1)
    h = embed_x.reshape(x.shape[0], -1)
    h = jnp.maximum(h @ params["w1"] + params["b1"], 0.0)
    h = jnp.maximum(h @ params["w2"] + params["b2"], 0.0)
    mlp = (h @ params["w3"] + params["b3"])[:, 0]
    return jax.nn.sigmoid(lin + fm + mlp)


def deep_fm_reference_bf16emb(x, params):
    """Reference mirroring the kernel's bf16-quantized embedding gather (f32 compute)."""
    idx = x + params["offsets"][None, :]
    embed_x = params["embed_table"][idx].astype(jnp.bfloat16).astype(jnp.float32)
    lin = jnp.sum(params["linear_table"][idx][..., 0], axis=1) + params["bias"][0, 0]
    s = jnp.sum(embed_x, axis=1)
    sq = jnp.sum(embed_x ** 2, axis=1)
    fm = 0.5 * jnp.sum(s * s - sq, axis=1)
    h = embed_x.reshape(x.shape[0], -1)
    h = jnp.maximum(h @ params["w1"] + params["b1"], 0.0)
    h = jnp.maximum(h @ params["w2"] + params["b2"], 0.0)
    mlp = (h @ params["w3"] + params["b3"])[:, 0]
    return jax.nn.sigmoid(lin + fm + mlp)


if __name__ == "__main__":
    key = jax.random.PRNGKey(0)
    field_dims = (10, 20, 30, 40)     # 4 fields
    embed_dim = 16
    mlp_dims = (64, 32)
    dropout = 0.2                     # no-op at inference
    batch = 8

    k_param, k_x = jax.random.split(key)
    params = make_params(k_param, field_dims, embed_dim, mlp_dims)

    def make_inputs(k, b):
        cols = [jax.random.randint(jax.random.fold_in(k, i), (b,), 0, d, jnp.int32)
                for i, d in enumerate(field_dims)]
        return jnp.stack(cols, axis=1)      # (b, num_fields) int32

    # Small case (single tile) and a multi-tile case (exercises padding + 2 tiles).
    for b in (batch, 300):
        x = make_inputs(k_x, b)
        y = deep_fm_forward(x, params)
        y = jax.block_until_ready(y)
        assert y.shape == (b,)

        # Check against a reference that mirrors the kernel's bf16 embedding gather.
        y_ref = deep_fm_reference_bf16emb(x, params)
        np.testing.assert_allclose(np.asarray(y), np.asarray(y_ref),
                                   rtol=1e-3, atol=1e-3)

        # Loose check against full-f32 PyTorch eval-mode semantics
        # (bf16 embedding quantization is intentional).
        y_f32 = deep_fm_reference_f32(x, params)
        np.testing.assert_allclose(np.asarray(y), np.asarray(y_f32),
                                   rtol=0, atol=3e-3)

    print("KERNEL_OK")
</pallas_src>

<mosaic_0001>
module attributes {stable_mosaic.version = 11 : i64} {
  func.func @dfm_kernel(%arg0: i32, %arg1: memref<64x128xbf16, #tpu.memory_space<vmem>>, %arg2: memref<1x128xf32, #tpu.memory_space<vmem>>, %arg3: memref<80x64xf32, #tpu.memory_space<vmem>>, %arg4: memref<32x64xf32, #tpu.memory_space<vmem>>, %arg5: memref<128x1xf32, #tpu.memory_space<vmem>>, %arg6: memref<1x128xf32, #tpu.memory_space<vmem>>) attributes {dimension_semantics = [#tpu.dimension_semantics<parallel>], iteration_bounds = array<i64: 1>, scalar_prefetch = 0 : i64, scratch_operands = 0 : i64, tpu.core_type = #tpu.core_type<tc>, window_params = [{transform_indices = @transform_0, window_bounds = array<i64: 64, 128>}, {transform_indices = @transform_1, window_bounds = array<i64: 1, 128>}, {pipeline_mode = #tpu.pipeline_mode<synchronous>, transform_indices = @transform_2, window_bounds = array<i64: 80, 64>}, {pipeline_mode = #tpu.pipeline_mode<synchronous>, transform_indices = @transform_3, window_bounds = array<i64: 32, 64>}, {pipeline_mode = #tpu.pipeline_mode<synchronous>, transform_indices = @transform_4, window_bounds = array<i64: 128, 1>}, {transform_indices = @transform_5, window_bounds = array<i64: 1, 128>}]} {
    %c0 = arith.constant 0 : index
    %c0_0 = arith.constant 0 : index
    %0 = vector.load %arg1[%c0, %c0_0] : memref<64x128xbf16, #tpu.memory_space<vmem>>, vector<64x128xbf16>
    %1 = arith.extf %0 : vector<64x128xbf16> to vector<64x128xf32>
    %c0_1 = arith.constant 0 : index
    %c0_2 = arith.constant 0 : index
    %2 = vector.load %arg3[%c0_1, %c0_2] : memref<80x64xf32, #tpu.memory_space<vmem>>, vector<80x64xf32>
    %cst = arith.constant dense<0.000000e+00> : vector<80x128xf32>
    %3 = tpu.matmul %2, %1, %cst {dimension_numbers = #tpu.dot_dimension_numbers<[1], [0], [0], [1], [0, 0, 1, 1], [], []>} : vector<80x64xf32>, vector<64x128xf32>, vector<80x128xf32> -> vector<80x128xf32>
    %4 = vector.extract_strided_slice %3 {offsets = [0, 0], sizes = [16, 128], strides = [1, 1]} : vector<80x128xf32> to vector<16x128xf32>
    %5 = arith.mulf %1, %1 : vector<64x128xf32>
    %cst_3 = arith.constant dense<0.000000e+00> : vector<128xf32>
    %6 = vector.multi_reduction <add>, %5, %cst_3 [0] : vector<64x128xf32> to vector<128xf32>
    %7 = vector.shape_cast %6 : vector<128xf32> to vector<1x128xf32>
    %8 = arith.mulf %4, %4 : vector<16x128xf32>
    %cst_4 = arith.constant dense<0.000000e+00> : vector<128xf32>
    %9 = vector.multi_reduction <add>, %8, %cst_4 [0] : vector<16x128xf32> to vector<128xf32>
    %10 = vector.shape_cast %9 : vector<128xf32> to vector<1x128xf32>
    %11 = arith.subf %10, %7 : vector<1x128xf32>
    %cst_5 = arith.constant 5.000000e-01 : f32
    %12 = vector.broadcast %cst_5 : f32 to vector<1x128xf32>
    %13 = arith.mulf %12, %11 : vector<1x128xf32>
    %c0_6 = arith.constant 0 : index
    %c0_7 = arith.constant 0 : index
    %14 = vector.load %arg5[%c0_6, %c0_7] : memref<128x1xf32, #tpu.memory_space<vmem>>, vector<128x1xf32>
    %15 = vector.extract_strided_slice %14 {offsets = [0, 0], sizes = [64, 1], strides = [1, 1]} : vector<128x1xf32> to vector<64x1xf32>
    %16 = vector.extract_strided_slice %14 {offsets = [64, 0], sizes = [32, 1], strides = [1, 1]} : vector<128x1xf32> to vector<32x1xf32>
    %17 = vector.extract_strided_slice %14 {offsets = [96, 0], sizes = [32, 1], strides = [1, 1]} : vector<128x1xf32> to vector<32x1xf32>
    %18 = vector.extract_strided_slice %3 {offsets = [16, 0], sizes = [64, 128], strides = [1, 1]} : vector<80x128xf32> to vector<64x128xf32>
    %19 = vector.broadcast %15 : vector<64x1xf32> to vector<64x128xf32>
    %20 = arith.addf %18, %19 : vector<64x128xf32>
    %cst_8 = arith.constant 0.000000e+00 : f32
    %21 = vector.broadcast %cst_8 : f32 to vector<64x128xf32>
    %22 = arith.maximumf %20, %21 : vector<64x128xf32>
    %c0_9 = arith.constant 0 : index
    %c0_10 = arith.constant 0 : index
    %23 = vector.load %arg4[%c0_9, %c0_10] : memref<32x64xf32, #tpu.memory_space<vmem>>, vector<32x64xf32>
    %cst_11 = arith.constant dense<0.000000e+00> : vector<32x128xf32>
    %24 = tpu.matmul %23, %22, %cst_11 {dimension_numbers = #tpu.dot_dimension_numbers<[1], [0], [0], [1], [0, 0, 1, 1], [], []>} : vector<32x64xf32>, vector<64x128xf32>, vector<32x128xf32> -> vector<32x128xf32>
    %25 = vector.broadcast %16 : vector<32x1xf32> to vector<32x128xf32>
    %26 = arith.addf %24, %25 : vector<32x128xf32>
    %cst_12 = arith.constant 0.000000e+00 : f32
    %27 = vector.broadcast %cst_12 : f32 to vector<32x128xf32>
    %28 = arith.maximumf %26, %27 : vector<32x128xf32>
    %29 = vector.broadcast %17 : vector<32x1xf32> to vector<32x128xf32>
    %30 = arith.mulf %28, %29 : vector<32x128xf32>
    %cst_13 = arith.constant dense<0.000000e+00> : vector<128xf32>
    %31 = vector.multi_reduction <add>, %30, %cst_13 [0] : vector<32x128xf32> to vector<128xf32>
    %32 = vector.shape_cast %31 : vector<128xf32> to vector<1x128xf32>
    %c0_14 = arith.constant 0 : index
    %c0_15 = arith.constant 0 : index
    %33 = vector.load %arg2[%c0_14, %c0_15] : memref<1x128xf32, #tpu.memory_space<vmem>>, vector<1x128xf32>
    %34 = arith.addf %33, %13 : vector<1x128xf32>
    %35 = arith.addf %34, %32 : vector<1x128xf32>
    %36 = arith.negf %35 : vector<1x128xf32>
    %37 = math.exp %36 : vector<1x128xf32>
    %cst_16 = arith.constant 1.000000e+00 : f32
    %38 = vector.broadcast %cst_16 : f32 to vector<1x128xf32>
    %39 = arith.addf %38, %37 : vector<1x128xf32>
    %40 = arith.divf %38, %39 : vector<1x128xf32>
    %c0_17 = arith.constant 0 : index
    %c0_18 = arith.constant 0 : index
    %41 = vector.load %arg6[%c0_17, %c0_18] : memref<1x128xf32, #tpu.memory_space<vmem>>, vector<1x128xf32>
    tpu.vector_store %arg6[%c0_17, %c0_18], %40 {strides = array<i32>} : memref<1x128xf32, #tpu.memory_space<vmem>>, vector<1x128xf32>,
    return
  }
  func.func @transform_0(%arg0: i32) -> (i32, i32) {
    %c0_i32 = arith.constant 0 : i32
    %c0_i32_0 = arith.constant 0 : i32
    return %c0_i32, %arg0 : i32, i32
  }
  func.func @transform_1(%arg0: i32) -> (i32, i32) {
    %c0_i32 = arith.constant 0 : i32
    %c0_i32_0 = arith.constant 0 : i32
    return %c0_i32, %arg0 : i32, i32
  }
  func.func @transform_2(%arg0: i32) -> (i32, i32) {
    %c0_i32 = arith.constant 0 : i32
    %c0_i32_0 = arith.constant 0 : i32
    %c0_i32_1 = arith.constant 0 : i32
    return %c0_i32, %c0_i32_0 : i32, i32
  }
  func.func @transform_3(%arg0: i32) -> (i32, i32) {
    %c0_i32 = arith.constant 0 : i32
    %c0_i32_0 = arith.constant 0 : i32
    %c0_i32_1 = arith.constant 0 : i32
    return %c0_i32, %c0_i32_0 : i32, i32
  }
  func.func @transform_4(%arg0: i32) -> (i32, i32) {
    %c0_i32 = arith.constant 0 : i32
    %c0_i32_0 = arith.constant 0 : i32
    %c0_i32_1 = arith.constant 0 : i32
    return %c0_i32, %c0_i32_0 : i32, i32
  }
  func.func @transform_5(%arg0: i32) -> (i32, i32) {
    %c0_i32 = arith.constant 0 : i32
    %c0_i32_0 = arith.constant 0 : i32
    return %c0_i32, %arg0 : i32, i32
  }
}

</mosaic_0001>

<llo_original>
// kernel: deep_fm_forward.1
$region0: #{deep_fm_forward.1}
  #allocation0 [shape = 'u32[]', space=smem, size = 0x4, offset = 0x4, fixed_abs, tag = 'smem constant byte address 0x4 - core index']
  #allocation1 [shape = 'u32[144,128]{1,0:T(1,128)}', space=vmem, size = 0x12000, scoped, tag = 'internal scratch']
  %s0 = inlined_call_operand.vmem [shape: bf16[64,128], index: 0, kind: input, shape index: {}]
  %s1 = inlined_call_operand.vmem [shape: f32[1,128], index: 1, kind: input, shape index: {}]
  %s2 = inlined_call_operand.vmem [shape: f32[80,64], index: 2, kind: input, shape index: {}]
  %s3 = inlined_call_operand.vmem [shape: f32[32,64], index: 3, kind: input, shape index: {}]
  %s4 = inlined_call_operand.vmem [shape: f32[128,1], index: 4, kind: input, shape index: {}]
  %s5 = inlined_call_operand.vmem [shape: f32[1,128], index: 5, kind: output, shape index: {}]
  %s6 = sld [smem:[#allocation0]]
  $region30: #{deep_fm_forward.1} parent=0
    _
  %s8 = ssub.s32 1, %s6
  %s9 = scalar_select 0, %s8, %s6
  // Predicated region
  $region2: #{deep_fm_forward.1} parent=0 // pred_check
    _
  $region3: #{deep_fm_forward.1} parent=0 // pred_check_branch
    %11 = sbr.rel (0) target = $region5
  $region4: #{deep_fm_forward.1} parent=0 // pred_region
    _
  $region5: #{deep_fm_forward.1} parent=0 // pred_fallthru
    _
  // Predicated region
  $region6: #{deep_fm_forward.1} parent=0 // pred_check
    _
  $region7: #{deep_fm_forward.1} parent=0 // pred_check_branch
    %13 = sbr.rel (0) target = $region9
  $region8: #{deep_fm_forward.1} parent=0 // pred_region
    _
  $region9: #{deep_fm_forward.1} parent=0 // pred_fallthru
    _
  // Predicated region
  $region10: #{deep_fm_forward.1} parent=0 // pred_check
    _
  $region11: #{deep_fm_forward.1} parent=0 // pred_check_branch
    %15 = sbr.rel (0) target = $region13
  $region12: #{deep_fm_forward.1} parent=0 // pred_region
    _
  $region13: #{deep_fm_forward.1} parent=0 // pred_fallthru
    _
  // Predicated region
  $region14: #{deep_fm_forward.1} parent=0 // pred_check
    _
  $region15: #{deep_fm_forward.1} parent=0 // pred_check_branch
    %17 = sbr.rel (0) target = $region17
  $region16: #{deep_fm_forward.1} parent=0 // pred_region
    _
  $region17: #{deep_fm_forward.1} parent=0 // pred_fallthru
    _
  // Predicated region
  $region18: #{deep_fm_forward.1} parent=0 // pred_check
    _
  $region19: #{deep_fm_forward.1} parent=0 // pred_check_branch
    %19 = sbr.rel (0) target = $region21
  $region20: #{deep_fm_forward.1} parent=0 // pred_region
    _
  $region21: #{deep_fm_forward.1} parent=0 // pred_fallthru
    _
  %v20 = vld [vmem:[%s0] sm:$0xf]
  %v21 = vld [vmem:[%s0 + $0x4] sm:$0xf]
  %v22 = vld [vmem:[%s0 + $0x8] sm:$0xf]
  %v23 = vld [vmem:[%s0 + $0xc] sm:$0xf]
  %v24 = vld [vmem:[%s0 + $0x10] sm:$0xf]
  %v25 = vld [vmem:[%s0 + $0x14] sm:$0xf]
  %v26 = vld [vmem:[%s0 + $0x18] sm:$0xf]
  %v27 = vld [vmem:[%s0 + $0x1c] sm:$0xf]
  %v28 = vunpack.c.l.bf16 %v20
  %v29 = vunpack.c.l.bf16 %v21
  %v30 = vunpack.c.l.bf16 %v22
  %v31 = vunpack.c.l.bf16 %v23
  %v32 = vunpack.c.l.bf16 %v24
  %v33 = vunpack.c.l.bf16 %v25
  %v34 = vunpack.c.l.bf16 %v26
  %v35 = vunpack.c.l.bf16 %v27
  %v36 = vld [vmem:[%s2] sm:$0xff]
  %v37 = vld [vmem:[%s2 + $0x8] sm:$0xff]
  %v38 = vld [vmem:[%s2 + $0x10] sm:$0xff]
  %v39 = vld [vmem:[%s2 + $0x18] sm:$0xff]
  %v40 = vld [vmem:[%s2 + $0x20] sm:$0xff]
  %v41 = vld [vmem:[%s2 + $0x28] sm:$0xff]
  %v42 = vld [vmem:[%s2 + $0x30] sm:$0xff]
  %v43 = vld [vmem:[%s2 + $0x38] sm:$0xff]
  %v44 = vld [vmem:[%s2 + $0x40] sm:$0xff]
  %v45 = vld [vmem:[%s2 + $0x48] sm:$0xff]
  %vm46 = vcmask 523264
  %v48 = vsel %vm46, %v36, 0
  %v51 = vsel %vm46, %v37, 0
  %v54 = vsel %vm46, %v38, 0
  %v57 = vsel %vm46, %v39, 0
  %v60 = vsel %vm46, %v40, 0
  %v63 = vsel %vm46, %v41, 0
  %v66 = vsel %vm46, %v42, 0
  %v69 = vsel %vm46, %v43, 0
  %v72 = vsel %vm46, %v44, 0
  %v75 = vsel %vm46, %v45, 0
  %77 = vmatprep.subr.mxu0 0.0
  %78 = vmatpush1.msra.mxu0 0.0
  %79 = vmatprep.subr.mxu0 0.0
  %80 = vmatpush1.msra.mxu0 0.0
  %81 = vmatprep.subr.mxu0 0.0
  %82 = vmatpush1.msra.mxu0 0.0
  %83 = vmatprep.subr.mxu0 0.0
  %84 = vmatpush1.msra.mxu0 0.0
  %85 = vmatprep.subr.mxu0 0.0
  %86 = vmatpush1.msra.mxu0 0.0
  %87 = vmatprep.subr.mxu0 0.0
  %88 = vmatpush1.msra.mxu0 0.0
  %89 = vmatprep.subr.mxu0 0.0
  %90 = vmatpush1.msra.mxu0 0.0
  %91 = vmatprep.subr.mxu0 0.0
  %92 = vmatpush1.msra.mxu0 0.0
  %93 = vmatprep.subr.mxu0 0.0
  %94 = vmatpush1.msra.mxu0 %v35
  %95 = vmatprep.subr.mxu0 0.0
  %96 = vmatpush1.msra.mxu0 %v34
  %97 = vmatprep.subr.mxu0 0.0
  %98 = vmatpush1.msra.mxu0 %v33
  %99 = vmatprep.subr.mxu0 0.0
  %100 = vmatpush1.msra.mxu0 %v32
  %101 = vmatprep.subr.mxu0 0.0
  %102 = vmatpush1.msra.mxu0 %v31
  %103 = vmatprep.subr.mxu0 0.0
  %104 = vmatpush1.msra.mxu0 %v30
  %105 = vmatprep.subr.mxu0 0.0
  %106 = vmatpush1.msra.mxu0 %v29
  %107 = vmatprep.subr.mxu0 0.0
  %108 = vmatpush1.msra.mxu0 %v28
  %109 = vmatprep.subr.mxu0 0.0
  %110 = vmatpush2.msra.mxu0 0.0
  %111 = vmatprep.subr.mxu0 0.0
  %112 = vmatpush2.msra.mxu0 0.0
  %113 = vmatprep.subr.mxu0 0.0
  %114 = vmatpush2.msra.mxu0 0.0
  %115 = vmatprep.subr.mxu0 0.0
  %116 = vmatpush2.msra.mxu0 0.0
  %117 = vmatprep.subr.mxu0 0.0
  %118 = vmatpush2.msra.mxu0 0.0
  %119 = vmatprep.subr.mxu0 0.0
  %120 = vmatpush2.msra.mxu0 0.0
  %121 = vmatprep.subr.mxu0 0.0
  %122 = vmatpush2.msra.mxu0 0.0
  %123 = vmatprep.subr.mxu0 0.0
  %124 = vmatpush2.msra.mxu0 0.0
  %125 = vmatprep.subr.mxu0 0.0
  %126 = vmatpush2.msra.mxu0 0.0
  %127 = vmatprep.subr.mxu0 0.0
  %128 = vmatpush2.msra.mxu0 0.0
  %129 = vmatprep.subr.mxu0 0.0
  %130 = vmatpush2.msra.mxu0 0.0
  %131 = vmatprep.subr.mxu0 0.0
  %132 = vmatpush2.msra.mxu0 0.0
  %133 = vmatprep.subr.mxu0 0.0
  %134 = vmatpush2.msra.mxu0 0.0
  %135 = vmatprep.subr.mxu0 0.0
  %136 = vmatpush2.msra.mxu0 0.0
  %137 = vmatprep.subr.mxu0 0.0
  %138 = vmatpush2.msra.mxu0 0.0
  %139 = vmatprep.subr.mxu0 0.0
  %140 = vmatpush2.msra.mxu0 0.0
  %141 = vmatprep.mubr.f32.mxu0 0.0
  %142 = vmatmul.mubr.f32.gmra.mxu0 %v48
  %v143 = vpop.f32.mrf.mxu0
  %v144 = vadd.f32 0.0, %v143
  %v145 = vpop.f32.mrf.mxu0
  %146 = vmatprep.mubr.f32.mxu0 0.0
  %147 = vmatmul.mubr.f32.gmra.mxu0 %v51
  %v148 = vpop.f32.mrf.mxu0
  %v149 = vadd.f32 0.0, %v148
  %v150 = vpop.f32.mrf.mxu0
  %151 = vmatprep.mubr.f32.mxu0 0.0
  %152 = vmatmul.mubr.f32.gmra.mxu0 %v54
  %v153 = vpop.f32.mrf.mxu0
  %v154 = vadd.f32 0.0, %v153
  %v155 = vpop.f32.mrf.mxu0
  %156 = vmatprep.mubr.f32.mxu0 0.0
  %157 = vmatmul.mubr.f32.gmra.mxu0 %v57
  %v158 = vpop.f32.mrf.mxu0
  %v159 = vadd.f32 0.0, %v158
  %v160 = vpop.f32.mrf.mxu0
  %161 = vmatprep.mubr.f32.mxu0 0.0
  %162 = vmatmul.mubr.f32.gmra.mxu0 %v60
  %v163 = vpop.f32.mrf.mxu0
  %v164 = vadd.f32 0.0, %v163
  %v165 = vpop.f32.mrf.mxu0
  %166 = vmatprep.mubr.f32.mxu0 0.0
  %167 = vmatmul.mubr.f32.gmra.mxu0 %v63
  %v168 = vpop.f32.mrf.mxu0
  %v169 = vadd.f32 0.0, %v168
  %v170 = vpop.f32.mrf.mxu0
  %171 = vmatprep.mubr.f32.mxu0 0.0
  %172 = vmatmul.mubr.f32.gmra.mxu0 %v66
  %v173 = vpop.f32.mrf.mxu0
  %v174 = vadd.f32 0.0, %v173
  %v175 = vpop.f32.mrf.mxu0
  %176 = vmatprep.mubr.f32.mxu0 0.0
  %177 = vmatmul.mubr.f32.gmra.mxu0 %v69
  %v178 = vpop.f32.mrf.mxu0
  %v179 = vadd.f32 0.0, %v178
  %v180 = vpop.f32.mrf.mxu0
  %181 = vmatprep.mubr.f32.mxu0 0.0
  %182 = vmatmul.mubr.f32.gmra.mxu0 %v72
  %v183 = vpop.f32.mrf.mxu0
  %v184 = vadd.f32 0.0, %v183
  %v185 = vpop.f32.mrf.mxu0
  %186 = vmatprep.mubr.f32.mxu0 0.0
  %187 = vmatmul.mubr.f32.gmra.mxu0 %v75
  %v188 = vpop.f32.mrf.mxu0
  %v189 = vadd.f32 0.0, %v188
  %v190 = vpop.f32.mrf.mxu0
  %191 = vdwg.mxu0
  %v192 = vmul.f32 %v28, %v28
  %v193 = vmul.f32 %v29, %v29
  %v194 = vmul.f32 %v30, %v30
  %v195 = vmul.f32 %v31, %v31
  %v196 = vmul.f32 %v32, %v32
  %v197 = vmul.f32 %v33, %v33
  %v198 = vmul.f32 %v34, %v34
  %v199 = vmul.f32 %v35, %v35
  %v200 = vadd.f32 %v192, %v193
  %v201 = vadd.f32 %v200, %v194
  %v202 = vadd.f32 %v201, %v195
  %v203 = vadd.f32 %v202, %v196
  %v204 = vadd.f32 %v203, %v197
  %v205 = vadd.f32 %v204, %v198
  %v206 = vadd.f32 %v205, %v199
  %v207 = vrot.slane %v206, 4
  %v208 = vadd.f32 %v206, %v207
  %v209 = vrot.slane %v208, 2
  %v210 = vadd.f32 %v208, %v209
  %v211 = vrot.slane %v210, 1
  %v212 = vadd.f32 %v210, %v211
  %v213 = vmul.f32 %v144, %v144
  %v214 = vmul.f32 %v149, %v149
  %v215 = vadd.f32 %v213, %v214
  %v216 = vrot.slane %v215, 4
  %v217 = vadd.f32 %v215, %v216
  %v218 = vrot.slane %v217, 2
  %v219 = vadd.f32 %v217, %v218
  %v220 = vrot.slane %v219, 1
  %v221 = vadd.f32 %v219, %v220
  %v222 = vsub.f32 %v221, %v212
  %v223 = vmul.f32 %v222, 0.5
  %v224 = vld [vmem:[%s4] sm:$0xff]
  %v225 = vld [vmem:[%s4 + $0x8] sm:$0xff]
  %v226 = vld [vmem:[%s4 + $0x10] sm:$0xff]
  %v227 = vld [vmem:[%s4 + $0x18] sm:$0xff]
  %v228 = vld [vmem:[%s4 + $0x20] sm:$0xff]
  %v229 = vld [vmem:[%s4 + $0x28] sm:$0xff]
  %v230 = vld [vmem:[%s4 + $0x30] sm:$0xff]
  %v231 = vld [vmem:[%s4 + $0x38] sm:$0xff]
  %v232 = vld [vmem:[%s4 + $0x40] sm:$0xff]
  %v233 = vld [vmem:[%s4 + $0x48] sm:$0xff]
  %v234 = vld [vmem:[%s4 + $0x50] sm:$0xff]
  %v235 = vld [vmem:[%s4 + $0x58] sm:$0xff]
  %v236 = vld [vmem:[%s4 + $0x60] sm:$0xff]
  %v237 = vld [vmem:[%s4 + $0x68] sm:$0xff]
  %v238 = vld [vmem:[%s4 + $0x70] sm:$0xff]
  %v239 = vld [vmem:[%s4 + $0x78] sm:$0xff]
  %241 = vset.pattern.permute.xlu0 0
  %242 = vperm.xlu0 %241, %v224
  %v243 = vpop.permute.xlu0 %242
  %246 = vset.pattern.permute.xlu0 0
  %247 = vperm.xlu0 %246, %v225
  %v248 = vpop.permute.xlu0 %247
  %251 = vset.pattern.permute.xlu0 0
  %252 = vperm.xlu0 %251, %v226
  %v253 = vpop.permute.xlu0 %252
  %256 = vset.pattern.permute.xlu0 0
  %257 = vperm.xlu0 %256, %v227
  %v258 = vpop.permute.xlu0 %257
  %261 = vset.pattern.permute.xlu0 0
  %262 = vperm.xlu0 %261, %v228
  %v263 = vpop.permute.xlu0 %262
  %266 = vset.pattern.permute.xlu0 0
  %267 = vperm.xlu0 %266, %v229
  %v268 = vpop.permute.xlu0 %267
  %271 = vset.pattern.permute.xlu0 0
  %272 = vperm.xlu0 %271, %v230
  %v273 = vpop.permute.xlu0 %272
  %276 = vset.pattern.permute.xlu0 0
  %277 = vperm.xlu0 %276, %v231
  %v278 = vpop.permute.xlu0 %277
  %v280 = vadd.f32 %v154, %v243
  %v281 = vadd.f32 %v159, %v248
  %v282 = vadd.f32 %v164, %v253
  %v283 = vadd.f32 %v169, %v258
  %v284 = vadd.f32 %v174, %v263
  %v285 = vadd.f32 %v179, %v268
  %v286 = vadd.f32 %v184, %v273
  %v287 = vadd.f32 %v189, %v278
  %v288 = vmax.f32 %v280, 0.0
  %v289 = vmax.f32 %v281, 0.0
  %v290 = vmax.f32 %v282, 0.0
  %v291 = vmax.f32 %v283, 0.0
  %v292 = vmax.f32 %v284, 0.0
  %v293 = vmax.f32 %v285, 0.0
  %v294 = vmax.f32 %v286, 0.0
  %v295 = vmax.f32 %v287, 0.0
  %v296 = vld [vmem:[%s3] sm:$0xff]
  %v297 = vld [vmem:[%s3 + $0x8] sm:$0xff]
  %v298 = vld [vmem:[%s3 + $0x10] sm:$0xff]
  %v299 = vld [vmem:[%s3 + $0x18] sm:$0xff]
  %301 = vset.pattern.permute.xlu0 0
  %302 = vperm.xlu0 %301, %v232
  %v303 = vpop.permute.xlu0 %302
  %306 = vset.pattern.permute.xlu0 0
  %307 = vperm.xlu0 %306, %v233
  %v308 = vpop.permute.xlu0 %307
  %311 = vset.pattern.permute.xlu0 0
  %312 = vperm.xlu0 %311, %v234
  %v313 = vpop.permute.xlu0 %312
  %316 = vset.pattern.permute.xlu0 0
  %317 = vperm.xlu0 %316, %v235
  %v318 = vpop.permute.xlu0 %317
  %v321 = vsel %vm46, %v296, 0
  %v324 = vsel %vm46, %v297, 0
  %v327 = vsel %vm46, %v298, 0
  %v330 = vsel %vm46, %v299, 0
  %332 = vmatprep.subr.mxu0 0.0
  %333 = vmatpush1.msra.mxu0 0.0
  %334 = vmatprep.subr.mxu0 0.0
  %335 = vmatpush1.msra.mxu0 0.0
  %336 = vmatprep.subr.mxu0 0.0
  %337 = vmatpush1.msra.mxu0 0.0
  %338 = vmatprep.subr.mxu0 0.0
  %339 = vmatpush1.msra.mxu0 0.0
  %340 = vmatprep.subr.mxu0 0.0
  %341 = vmatpush1.msra.mxu0 0.0
  %342 = vmatprep.subr.mxu0 0.0
  %343 = vmatpush1.msra.mxu0 0.0
  %344 = vmatprep.subr.mxu0 0.0
  %345 = vmatpush1.msra.mxu0 0.0
  %346 = vmatprep.subr.mxu0 0.0
  %347 = vmatpush1.msra.mxu0 0.0
  %348 = vmatprep.subr.mxu0 0.0
  %349 = vmatpush1.msra.mxu0 %v295
  %350 = vmatprep.subr.mxu0 0.0
  %351 = vmatpush1.msra.mxu0 %v294
  %352 = vmatprep.subr.mxu0 0.0
  %353 = vmatpush1.msra.mxu0 %v293
  %354 = vmatprep.subr.mxu0 0.0
  %355 = vmatpush1.msra.mxu0 %v292
  %356 = vmatprep.subr.mxu0 0.0
  %357 = vmatpush1.msra.mxu0 %v291
  %358 = vmatprep.subr.mxu0 0.0
  %359 = vmatpush1.msra.mxu0 %v290
  %360 = vmatprep.subr.mxu0 0.0
  %361 = vmatpush1.msra.mxu0 %v289
  %362 = vmatprep.subr.mxu0 0.0
  %363 = vmatpush1.msra.mxu0 %v288
  %364 = vmatprep.subr.mxu0 0.0
  %365 = vmatpush2.msra.mxu0 0.0
  %366 = vmatprep.subr.mxu0 0.0
  %367 = vmatpush2.msra.mxu0 0.0
  %368 = vmatprep.subr.mxu0 0.0
  %369 = vmatpush2.msra.mxu0 0.0
  %370 = vmatprep.subr.mxu0 0.0
  %371 = vmatpush2.msra.mxu0 0.0
  %372 = vmatprep.subr.mxu0 0.0
  %373 = vmatpush2.msra.mxu0 0.0
  %374 = vmatprep.subr.mxu0 0.0
  %375 = vmatpush2.msra.mxu0 0.0
  %376 = vmatprep.subr.mxu0 0.0
  %377 = vmatpush2.msra.mxu0 0.0
  %378 = vmatprep.subr.mxu0 0.0
  %379 = vmatpush2.msra.mxu0 0.0
  %380 = vmatprep.subr.mxu0 0.0
  %381 = vmatpush2.msra.mxu0 0.0
  %382 = vmatprep.subr.mxu0 0.0
  %383 = vmatpush2.msra.mxu0 0.0
  %384 = vmatprep.subr.mxu0 0.0
  %385 = vmatpush2.msra.mxu0 0.0
  %386 = vmatprep.subr.mxu0 0.0
  %387 = vmatpush2.msra.mxu0 0.0
  %388 = vmatprep.subr.mxu0 0.0
  %389 = vmatpush2.msra.mxu0 0.0
  %390 = vmatprep.subr.mxu0 0.0
  %391 = vmatpush2.msra.mxu0 0.0
  %392 = vmatprep.subr.mxu0 0.0
  %393 = vmatpush2.msra.mxu0 0.0
  %394 = vmatprep.subr.mxu0 0.0
  %395 = vmatpush2.msra.mxu0 0.0
  %396 = vmatprep.mubr.f32.mxu0 0.0
  %397 = vmatmul.mubr.f32.gmra.mxu0 %v321
  %v398 = vpop.f32.mrf.mxu0
  %v399 = vadd.f32 %v303, %v398
  %v400 = vpop.f32.mrf.mxu0
  %401 = vmatprep.mubr.f32.mxu0 0.0
  %402 = vmatmul.mubr.f32.gmra.mxu0 %v324
  %v403 = vpop.f32.mrf.mxu0
  %v404 = vadd.f32 %v308, %v403
  %v405 = vpop.f32.mrf.mxu0
  %406 = vmatprep.mubr.f32.mxu0 0.0
  %407 = vmatmul.mubr.f32.gmra.mxu0 %v327
  %v408 = vpop.f32.mrf.mxu0
  %v409 = vadd.f32 %v313, %v408
  %v410 = vpop.f32.mrf.mxu0
  %411 = vmatprep.mubr.f32.mxu0 0.0
  %412 = vmatmul.mubr.f32.gmra.mxu0 %v330
  %v413 = vpop.f32.mrf.mxu0
  %v414 = vadd.f32 %v318, %v413
  %v415 = vpop.f32.mrf.mxu0
  %416 = vdwg.mxu0
  %v417 = vmax.f32 %v399, 0.0
  %v418 = vmax.f32 %v404, 0.0
  %v419 = vmax.f32 %v409, 0.0
  %v420 = vmax.f32 %v414, 0.0
  %422 = vset.pattern.permute.xlu0 0
  %423 = vperm.xlu0 %422, %v236
  %v424 = vpop.permute.xlu0 %423
  %427 = vset.pattern.permute.xlu0 0
  %428 = vperm.xlu0 %427, %v237
  %v429 = vpop.permute.xlu0 %428
  %432 = vset.pattern.permute.xlu0 0
  %433 = vperm.xlu0 %432, %v238
  %v434 = vpop.permute.xlu0 %433
  %437 = vset.pattern.permute.xlu0 0
  %438 = vperm.xlu0 %437, %v239
  %v439 = vpop.permute.xlu0 %438
  %v441 = vmul.f32 %v417, %v424
  %v442 = vmul.f32 %v418, %v429
  %v443 = vmul.f32 %v419, %v434
  %v444 = vmul.f32 %v420, %v439
  %v445 = vadd.f32 %v441, %v442
  %v446 = vadd.f32 %v445, %v443
  %v447 = vadd.f32 %v446, %v444
  %v448 = vrot.slane %v447, 4
  %v449 = vadd.f32 %v447, %v448
  %v450 = vrot.slane %v449, 2
  %v451 = vadd.f32 %v449, %v450
  %v452 = vrot.slane %v451, 1
  %v453 = vadd.f32 %v451, %v452
  %v454 = vld [vmem:[%s1] sm:$0x1]
  %v455 = vadd.f32 %v454, %v223
  %v456 = vadd.f32 %v455, %v453
  %v457 = vxor.u32 %v456, 2147483648
  %v458 = vmul.f32 %v457, 1.442695
  %v459 = vpow.pop %v458
  %v460 = vadd.f32 %v459, 1.0
  %v461 = vrcp.pop %v460
  %v462 = vmul.f32 1.0, %v461
  %463 = vst [vmem:[%s5] sm:$0x1] %v462
  // Predicated region
  $region22: #{deep_fm_forward.1} parent=0 // pred_check
    _
  $region23: #{deep_fm_forward.1} parent=0 // pred_check_branch
    %465 = sbr.rel (0) target = $region25
  $region24: #{deep_fm_forward.1} parent=0 // pred_region
    _
  $region25: #{deep_fm_forward.1} parent=0 // pred_fallthru
    _
  // Predicated region
  $region26: #{deep_fm_forward.1} parent=0 // pred_check
    _
  $region27: #{deep_fm_forward.1} parent=0 // pred_check_branch
    %467 = sbr.rel (0) target = $region29
  $region28: #{deep_fm_forward.1} parent=0 // pred_region
    _
  $region29: #{deep_fm_forward.1} parent=0 // pred_fallthru
    _

</llo_original>
